<compile_context>
chip_gen: v6e
topology: v6e:2x2x1
jax: 0.10.0
libtpu: 0.0.40
codegen_flags: <defaults>
</compile_context>

<pallas_src>
import functools

import jax
import jax.numpy as jnp
from jax.experimental import pallas as pl
from jax.experimental.pallas import tpu as pltpu


def _round_up(n, m):
    return ((n + m - 1) // m) * m


def _discriminator_kernel(x_ref, w1_ref, b1_ref, w2_ref, b2_ref, w3_ref, b3_ref,
                          o_ref):
    """Fused Linear->ReLU->Linear->ReLU->Linear on one [TB, 128] batch tile."""
    mm_dtype = w1_ref.dtype  # bf16 on the fast path, f32 otherwise
    x = x_ref[...]                                                      # [TB, 128]
    # Layer 1: [TB,128] @ [128,512], f32 accumulate; bias + ReLU in f32.
    h1 = jnp.dot(x, w1_ref[...], preferred_element_type=jnp.float32)   # [TB, 512]
    h1 = jnp.maximum(h1 + b1_ref[...], 0.0).astype(mm_dtype)
    # Layer 2: [TB,512] @ [512,512]
    h2 = jnp.dot(h1, w2_ref[...], preferred_element_type=jnp.float32)  # [TB, 512]
    h2 = jnp.maximum(h2 + b2_ref[...], 0.0).astype(mm_dtype)
    # Layer 3: [TB,512] @ [512,128] (output dim zero-padded 2 -> 128 so the
    # final store is lane-dense / unmasked).
    out = jnp.dot(h2, w3_ref[...], preferred_element_type=jnp.float32)  # [TB, 128]
    o_ref[...] = (out + b3_ref[...]).astype(o_ref.dtype)


@functools.partial(jax.jit, static_argnames=("block_b", "compute_dtype"))
def discriminator_forward(x, w1, b1, w2, b2, w3, b3, *, block_b=None,
                          compute_dtype=jnp.float32):
    B, D_in = x.shape
    D_h = w1.shape[1]
    D_out = w3.shape[1]

    # MXU / lane friendly padded sizes.
    D_in_p = _round_up(D_in, 128)               # 128 -> 128
    D_h_p = _round_up(D_h, 128)                 # 500 -> 512
    D_out_p = _round_up(max(D_out, 128), 128)   # 2   -> 128

    if block_b is None:
        # Cap the tile at 256 rows (v6e/v7x MXU M dim; pass block_b=128 on
        # v5e).  Above the cap, split into the fewest tiles and size them to
        # minimize zero-padded rows (sublane-aligned to 8).
        if B <= 256:
            block_b = max(8, _round_up(B, 8))
        else:
            n_tiles = -(-B // 256)                       # ceil(B / 256)
            block_b = _round_up(-(-B // n_tiles), 8)     # ceil(B / n_tiles) -> x8
    B_p = _round_up(B, block_b)

    def pad2(a, rows, cols):
        return jnp.pad(a, ((0, rows - a.shape[0]), (0, cols - a.shape[1])))

    # Matmul operands in compute_dtype (bf16 halves weight DMA / vreg pressure
    # on v6e/v7x); biases stay f32 — they are added to the f32 accumulator.
    x_p = pad2(x, B_p, D_in_p).astype(compute_dtype)
    w1_p = pad2(w1, D_in_p, D_h_p).astype(compute_dtype)
    w2_p = pad2(w2, D_h_p, D_h_p).astype(compute_dtype)
    w3_p = pad2(w3, D_h_p, D_out_p).astype(compute_dtype)
    b1_p = pad2(b1, 1, D_h_p).astype(jnp.float32)
    b2_p = pad2(b2, 1, D_h_p).astype(jnp.float32)
    b3_p = pad2(b3, 1, D_out_p).astype(jnp.float32)

    grid = (B_p // block_b,)
    full = lambda i: (0, 0)

    flops = 2 * B_p * (D_in_p * D_h_p + D_h_p * D_h_p + D_h_p * D_out_p)
    bytes_accessed = (
        x_p.size * x_p.dtype.itemsize
        + w1_p.size * w1_p.dtype.itemsize
        + w2_p.size * w2_p.dtype.itemsize
        + w3_p.size * w3_p.dtype.itemsize
        + (b1_p.size + b2_p.size + b3_p.size) * 4
        + B_p * D_out_p * x.dtype.itemsize)

    out = pl.pallas_call(
        _discriminator_kernel,
        out_shape=jax.ShapeDtypeStruct((B_p, D_out_p), x.dtype),
        grid_spec=pltpu.PrefetchScalarGridSpec(
            num_scalar_prefetch=0,
            grid=grid,
            in_specs=[
                pl.BlockSpec((block_b, D_in_p), lambda i: (i, 0)),  # x tile
                pl.BlockSpec((D_in_p, D_h_p), full),                # W1 (full)
                pl.BlockSpec((1, D_h_p), full),                     # b1
                pl.BlockSpec((D_h_p, D_h_p), full),                 # W2
                pl.BlockSpec((1, D_h_p), full),                     # b2
                pl.BlockSpec((D_h_p, D_out_p), full),               # W3
                pl.BlockSpec((1, D_out_p), full),                   # b3
            ],
            out_specs=pl.BlockSpec((block_b, D_out_p), lambda i: (i, 0)),
        ),
        compiler_params=pltpu.CompilerParams(
            dimension_semantics=("parallel",)),
        cost_estimate=pl.CostEstimate(
            flops=flops, transcendentals=0, bytes_accessed=bytes_accessed),
    )(x_p, w1_p, b1_p, w2_p, b2_p, w3_p, b3_p)

    # Drop batch padding and the zero-padded output columns.
    return out[:B, :D_out]


def init_linear_params(key, fan_in, fan_out, dtype=jnp.float32):
    # Mimics PyTorch nn.Linear default init: U(-1/sqrt(fan_in), 1/sqrt(fan_in)).
    kw, kb = jax.random.split(key)
    bound = 1.0 / jnp.sqrt(fan_in)
    # Stored as [in, out] so the kernel computes x @ W directly.
    w = jax.random.uniform(kw, (fan_in, fan_out), dtype, -bound, bound)
    b = jax.random.uniform(kb, (1, fan_out), dtype, -bound, bound)
    return w, b


def _reference(x, w1, b1, w2, b2, w3, b3):
    h1 = jnp.maximum(x @ w1 + b1, 0.0)
    h2 = jnp.maximum(h1 @ w2 + b2, 0.0)
    return h2 @ w3 + b3


if __name__ == "__main__":
    key = jax.random.PRNGKey(0)
    k_x, k1, k2, k3 = jax.random.split(key, 4)

    D_IN, D_H, D_OUT = 128, 500, 2
    B = 32  # small batch for the correctness check

    x = jax.random.normal(k_x, (B, D_IN), jnp.float32)
    w1, b1 = init_linear_params(k1, D_IN, D_H)
    w2, b2 = init_linear_params(k2, D_H, D_H)
    w3, b3 = init_linear_params(k3, D_H, D_OUT)

    ref = _reference(x, w1, b1, w2, b2, w3, b3)

    # f32 compute path.
    out_f32 = jax.block_until_ready(
        discriminator_forward(x, w1, b1, w2, b2, w3, b3))
    assert out_f32.shape == (B, D_OUT)
    assert jnp.allclose(out_f32, ref, atol=1e-4, rtol=1e-4)

    # bf16 weights/activations with f32 accumulation (v6e/v7x MXU fast path).
    out_bf16 = jax.block_until_ready(
        discriminator_forward(x, w1, b1, w2, b2, w3, b3,
                              compute_dtype=jnp.bfloat16))
    assert out_bf16.shape == (B, D_OUT)
    assert jnp.allclose(out_bf16, ref, atol=1e-1, rtol=1e-1)

    # Larger, non-aligned batch: exercises waste-minimizing tile selection
    # (300 -> 2 tiles of 152 rows), batch zero-padding, and a multi-step
    # "parallel" grid (shards across both v7x TensorCores).
    B2 = 300
    x2 = jax.random.normal(jax.random.PRNGKey(1), (B2, D_IN), jnp.float32)
    out2 = jax.block_until_ready(
        discriminator_forward(x2, w1, b1, w2, b2, w3, b3))
    ref2 = _reference(x2, w1, b1, w2, b2, w3, b3)
    assert out2.shape == (B2, D_OUT)
    assert jnp.allclose(out2, ref2, atol=1e-4, rtol=1e-4)

    print("KERNEL_OK")
</pallas_src>

<mosaic_0001>
module attributes {stable_mosaic.version = 11 : i64} {
  func.func @_discriminator_kernel(%arg0: i32, %arg1: memref<32x128xf32, #tpu.memory_space<vmem>>, %arg2: memref<128x512xf32, #tpu.memory_space<vmem>>, %arg3: memref<1x512xf32, #tpu.memory_space<vmem>>, %arg4: memref<512x512xf32, #tpu.memory_space<vmem>>, %arg5: memref<1x512xf32, #tpu.memory_space<vmem>>, %arg6: memref<512x128xf32, #tpu.memory_space<vmem>>, %arg7: memref<1x128xf32, #tpu.memory_space<vmem>>, %arg8: memref<32x128xf32, #tpu.memory_space<vmem>>) attributes {dimension_semantics = [#tpu.dimension_semantics<parallel>], iteration_bounds = array<i64: 1>, scalar_prefetch = 0 : i64, scratch_operands = 0 : i64, tpu.core_type = #tpu.core_type<tc>, window_params = [{transform_indices = @transform_0, window_bounds = array<i64: 32, 128>}, {pipeline_mode = #tpu.pipeline_mode<synchronous>, transform_indices = @transform_1, window_bounds = array<i64: 128, 512>}, {pipeline_mode = #tpu.pipeline_mode<synchronous>, transform_indices = @transform_2, window_bounds = array<i64: 1, 512>}, {pipeline_mode = #tpu.pipeline_mode<synchronous>, transform_indices = @transform_3, window_bounds = array<i64: 512, 512>}, {pipeline_mode = #tpu.pipeline_mode<synchronous>, transform_indices = @transform_4, window_bounds = array<i64: 1, 512>}, {pipeline_mode = #tpu.pipeline_mode<synchronous>, transform_indices = @transform_5, window_bounds = array<i64: 512, 128>}, {pipeline_mode = #tpu.pipeline_mode<synchronous>, transform_indices = @transform_6, window_bounds = array<i64: 1, 128>}, {transform_indices = @transform_7, window_bounds = array<i64: 32, 128>}]} {
    %c0 = arith.constant 0 : index
    %c0_0 = arith.constant 0 : index
    %0 = vector.load %arg1[%c0, %c0_0] : memref<32x128xf32, #tpu.memory_space<vmem>>, vector<32x128xf32>
    %c0_1 = arith.constant 0 : index
    %c0_2 = arith.constant 0 : index
    %1 = vector.load %arg2[%c0_1, %c0_2] : memref<128x512xf32, #tpu.memory_space<vmem>>, vector<128x512xf32>
    %cst = arith.constant dense<0.000000e+00> : vector<32x512xf32>
    %2 = tpu.matmul %0, %1, %cst {dimension_numbers = #tpu.dot_dimension_numbers<[1], [0], [0], [1], [0, 0, 1, 1], [], []>} : vector<32x128xf32>, vector<128x512xf32>, vector<32x512xf32> -> vector<32x512xf32>
    %c0_3 = arith.constant 0 : index
    %c0_4 = arith.constant 0 : index
    %3 = vector.load %arg3[%c0_3, %c0_4] : memref<1x512xf32, #tpu.memory_space<vmem>>, vector<1x512xf32>
    %4 = vector.broadcast %3 : vector<1x512xf32> to vector<32x512xf32>
    %5 = arith.addf %2, %4 : vector<32x512xf32>
    %cst_5 = arith.constant 0.000000e+00 : f32
    %6 = vector.broadcast %cst_5 : f32 to vector<32x512xf32>
    %7 = arith.maximumf %5, %6 : vector<32x512xf32>
    %c0_6 = arith.constant 0 : index
    %c0_7 = arith.constant 0 : index
    %8 = vector.load %arg4[%c0_6, %c0_7] : memref<512x512xf32, #tpu.memory_space<vmem>>, vector<512x512xf32>
    %cst_8 = arith.constant dense<0.000000e+00> : vector<32x512xf32>
    %9 = tpu.matmul %7, %8, %cst_8 {dimension_numbers = #tpu.dot_dimension_numbers<[1], [0], [0], [1], [0, 0, 1, 1], [], []>} : vector<32x512xf32>, vector<512x512xf32>, vector<32x512xf32> -> vector<32x512xf32>
    %c0_9 = arith.constant 0 : index
    %c0_10 = arith.constant 0 : index
    %10 = vector.load %arg5[%c0_9, %c0_10] : memref<1x512xf32, #tpu.memory_space<vmem>>, vector<1x512xf32>
    %11 = vector.broadcast %10 : vector<1x512xf32> to vector<32x512xf32>
    %12 = arith.addf %9, %11 : vector<32x512xf32>
    %cst_11 = arith.constant 0.000000e+00 : f32
    %13 = vector.broadcast %cst_11 : f32 to vector<32x512xf32>
    %14 = arith.maximumf %12, %13 : vector<32x512xf32>
    %c0_12 = arith.constant 0 : index
    %c0_13 = arith.constant 0 : index
    %15 = vector.load %arg6[%c0_12, %c0_13] : memref<512x128xf32, #tpu.memory_space<vmem>>, vector<512x128xf32>
    %cst_14 = arith.constant dense<0.000000e+00> : vector<32x128xf32>
    %16 = tpu.matmul %14, %15, %cst_14 {dimension_numbers = #tpu.dot_dimension_numbers<[1], [0], [0], [1], [0, 0, 1, 1], [], []>} : vector<32x512xf32>, vector<512x128xf32>, vector<32x128xf32> -> vector<32x128xf32>
    %c0_15 = arith.constant 0 : index
    %c0_16 = arith.constant 0 : index
    %17 = vector.load %arg7[%c0_15, %c0_16] : memref<1x128xf32, #tpu.memory_space<vmem>>, vector<1x128xf32>
    %18 = vector.broadcast %17 : vector<1x128xf32> to vector<32x128xf32>
    %19 = arith.addf %16, %18 : vector<32x128xf32>
    %c0_17 = arith.constant 0 : index
    %c0_18 = arith.constant 0 : index
    %20 = vector.load %arg8[%c0_17, %c0_18] : memref<32x128xf32, #tpu.memory_space<vmem>>, vector<32x128xf32>
    tpu.vector_store %arg8[%c0_17, %c0_18], %19 {strides = array<i32>} : memref<32x128xf32, #tpu.memory_space<vmem>>, vector<32x128xf32>,
    return
  }
  func.func @transform_0(%arg0: i32) -> (i32, i32) {
    %c0_i32 = arith.constant 0 : i32
    %c0_i32_0 = arith.constant 0 : i32
    return %arg0, %c0_i32 : i32, i32
  }
  func.func @transform_1(%arg0: i32) -> (i32, i32) {
    %c0_i32 = arith.constant 0 : i32
    %c0_i32_0 = arith.constant 0 : i32
    %c0_i32_1 = arith.constant 0 : i32
    return %c0_i32, %c0_i32_0 : i32, i32
  }
  func.func @transform_2(%arg0: i32) -> (i32, i32) {
    %c0_i32 = arith.constant 0 : i32
    %c0_i32_0 = arith.constant 0 : i32
    %c0_i32_1 = arith.constant 0 : i32
    return %c0_i32, %c0_i32_0 : i32, i32
  }
  func.func @transform_3(%arg0: i32) -> (i32, i32) {
    %c0_i32 = arith.constant 0 : i32
    %c0_i32_0 = arith.constant 0 : i32
    %c0_i32_1 = arith.constant 0 : i32
    return %c0_i32, %c0_i32_0 : i32, i32
  }
  func.func @transform_4(%arg0: i32) -> (i32, i32) {
    %c0_i32 = arith.constant 0 : i32
    %c0_i32_0 = arith.constant 0 : i32
    %c0_i32_1 = arith.constant 0 : i32
    return %c0_i32, %c0_i32_0 : i32, i32
  }
  func.func @transform_5(%arg0: i32) -> (i32, i32) {
    %c0_i32 = arith.constant 0 : i32
    %c0_i32_0 = arith.constant 0 : i32
    %c0_i32_1 = arith.constant 0 : i32
    return %c0_i32, %c0_i32_0 : i32, i32
  }
  func.func @transform_6(%arg0: i32) -> (i32, i32) {
    %c0_i32 = arith.constant 0 : i32
    %c0_i32_0 = arith.constant 0 : i32
    %c0_i32_1 = arith.constant 0 : i32
    return %c0_i32, %c0_i32_0 : i32, i32
  }
  func.func @transform_7(%arg0: i32) -> (i32, i32) {
    %c0_i32 = arith.constant 0 : i32
    %c0_i32_0 = arith.constant 0 : i32
    return %arg0, %c0_i32 : i32, i32
  }
}

</mosaic_0001>

<llo_original>
// kernel: discriminator_forward.1
$region0: #{discriminator_forward.1}
  #allocation0 [shape = 'u32[]', space=smem, size = 0x4, offset = 0x4, fixed_abs, tag = 'smem constant byte address 0x4 - core index']
  #allocation1 [shape = 'u32[144,128]{1,0:T(1,128)}', space=vmem, size = 0x12000, scoped, tag = 'internal scratch']
  %s0 = inlined_call_operand.vmem [shape: f32[32,128], index: 0, kind: input, shape index: {}]
  %s1 = inlined_call_operand.vmem [shape: f32[128,512], index: 1, kind: input, shape index: {}]
  %s2 = inlined_call_operand.vmem [shape: f32[1,512], index: 2, kind: input, shape index: {}]
  %s3 = inlined_call_operand.vmem [shape: f32[512,512], index: 3, kind: input, shape index: {}]
  %s4 = inlined_call_operand.vmem [shape: f32[1,512], index: 4, kind: input, shape index: {}]
  %s5 = inlined_call_operand.vmem [shape: f32[512,128], index: 5, kind: input, shape index: {}]
  %s6 = inlined_call_operand.vmem [shape: f32[1,128], index: 6, kind: input, shape index: {}]
  %s7 = inlined_call_operand.vmem [shape: f32[32,128], index: 7, kind: output, shape index: {}]
  %s8 = sld [smem:[#allocation0]]
  $region38: #{discriminator_forward.1} parent=0
    _
  %s10 = ssub.s32 1, %s8
  %s11 = scalar_select 0, %s10, %s8
  // Predicated region
  $region2: #{discriminator_forward.1} parent=0 // pred_check
    _
  $region3: #{discriminator_forward.1} parent=0 // pred_check_branch
    %13 = sbr.rel (0) target = $region5
  $region4: #{discriminator_forward.1} parent=0 // pred_region
    _
  $region5: #{discriminator_forward.1} parent=0 // pred_fallthru
    _
  // Predicated region
  $region6: #{discriminator_forward.1} parent=0 // pred_check
    _
  $region7: #{discriminator_forward.1} parent=0 // pred_check_branch
    %15 = sbr.rel (0) target = $region9
  $region8: #{discriminator_forward.1} parent=0 // pred_region
    _
  $region9: #{discriminator_forward.1} parent=0 // pred_fallthru
    _
  // Predicated region
  $region10: #{discriminator_forward.1} parent=0 // pred_check
    _
  $region11: #{discriminator_forward.1} parent=0 // pred_check_branch
    %17 = sbr.rel (0) target = $region13
  $region12: #{discriminator_forward.1} parent=0 // pred_region
    _
  $region13: #{discriminator_forward.1} parent=0 // pred_fallthru
    _
  // Predicated region
  $region14: #{discriminator_forward.1} parent=0 // pred_check
    _
  $region15: #{discriminator_forward.1} parent=0 // pred_check_branch
    %19 = sbr.rel (0) target = $region17
  $region16: #{discriminator_forward.1} parent=0 // pred_region
    _
  $region17: #{discriminator_forward.1} parent=0 // pred_fallthru
    _
  // Predicated region
  $region18: #{discriminator_forward.1} parent=0 // pred_check
    _
  $region19: #{discriminator_forward.1} parent=0 // pred_check_branch
    %21 = sbr.rel (0) target = $region21
  $region20: #{discriminator_forward.1} parent=0 // pred_region
    _
  $region21: #{discriminator_forward.1} parent=0 // pred_fallthru
    _
  // Predicated region
  $region22: #{discriminator_forward.1} parent=0 // pred_check
    _
  $region23: #{discriminator_forward.1} parent=0 // pred_check_branch
    %23 = sbr.rel (0) target = $region25
  $region24: #{discriminator_forward.1} parent=0 // pred_region
    _
  $region25: #{discriminator_forward.1} parent=0 // pred_fallthru
    _
  // Predicated region
  $region26: #{discriminator_forward.1} parent=0 // pred_check
    _
  $region27: #{discriminator_forward.1} parent=0 // pred_check_branch
    %25 = sbr.rel (0) target = $region29
  $region28: #{discriminator_forward.1} parent=0 // pred_region
    _
  $region29: #{discriminator_forward.1} parent=0 // pred_fallthru
    _
  %v26 = vld [vmem:[%s0] sm:$0xff]
  %v27 = vld [vmem:[%s0 + $0x8] sm:$0xff]
  %v28 = vld [vmem:[%s0 + $0x10] sm:$0xff]
  %v29 = vld [vmem:[%s0 + $0x18] sm:$0xff]
  %v30 = vld [vmem:[%s1] sm:$0xff]
  %v31 = vld [vmem:[%s1 + $0x8] sm:$0xff]
  %v32 = vld [vmem:[%s1 + $0x10] sm:$0xff]
  %v33 = vld [vmem:[%s1 + $0x18] sm:$0xff]
  %v34 = vld [vmem:[%s1 + $0x20] sm:$0xff]
  %v35 = vld [vmem:[%s1 + $0x28] sm:$0xff]
  %v36 = vld [vmem:[%s1 + $0x30] sm:$0xff]
  %v37 = vld [vmem:[%s1 + $0x38] sm:$0xff]
  %v38 = vld [vmem:[%s1 + $0x40] sm:$0xff]
  %v39 = vld [vmem:[%s1 + $0x48] sm:$0xff]
  %v40 = vld [vmem:[%s1 + $0x50] sm:$0xff]
  %v41 = vld [vmem:[%s1 + $0x58] sm:$0xff]
  %v42 = vld [vmem:[%s1 + $0x60] sm:$0xff]
  %v43 = vld [vmem:[%s1 + $0x68] sm:$0xff]
  %v44 = vld [vmem:[%s1 + $0x70] sm:$0xff]
  %v45 = vld [vmem:[%s1 + $0x78] sm:$0xff]
  %v46 = vld [vmem:[%s1 + $0x80] sm:$0xff]
  %v47 = vld [vmem:[%s1 + $0x88] sm:$0xff]
  %v48 = vld [vmem:[%s1 + $0x90] sm:$0xff]
  %v49 = vld [vmem:[%s1 + $0x98] sm:$0xff]
  %v50 = vld [vmem:[%s1 + $0xa0] sm:$0xff]
  %v51 = vld [vmem:[%s1 + $0xa8] sm:$0xff]
  %v52 = vld [vmem:[%s1 + $0xb0] sm:$0xff]
  %v53 = vld [vmem:[%s1 + $0xb8] sm:$0xff]
  %v54 = vld [vmem:[%s1 + $0xc0] sm:$0xff]
  %v55 = vld [vmem:[%s1 + $0xc8] sm:$0xff]
  %v56 = vld [vmem:[%s1 + $0xd0] sm:$0xff]
  %v57 = vld [vmem:[%s1 + $0xd8] sm:$0xff]
  %v58 = vld [vmem:[%s1 + $0xe0] sm:$0xff]
  %v59 = vld [vmem:[%s1 + $0xe8] sm:$0xff]
  %v60 = vld [vmem:[%s1 + $0xf0] sm:$0xff]
  %v61 = vld [vmem:[%s1 + $0xf8] sm:$0xff]
  %v62 = vld [vmem:[%s1 + $0x100] sm:$0xff]
  %v63 = vld [vmem:[%s1 + $0x108] sm:$0xff]
  %v64 = vld [vmem:[%s1 + $0x110] sm:$0xff]
  %v65 = vld [vmem:[%s1 + $0x118] sm:$0xff]
  %v66 = vld [vmem:[%s1 + $0x120] sm:$0xff]
  %v67 = vld [vmem:[%s1 + $0x128] sm:$0xff]
  %v68 = vld [vmem:[%s1 + $0x130] sm:$0xff]
  %v69 = vld [vmem:[%s1 + $0x138] sm:$0xff]
  %v70 = vld [vmem:[%s1 + $0x140] sm:$0xff]
  %v71 = vld [vmem:[%s1 + $0x148] sm:$0xff]
  %v72 = vld [vmem:[%s1 + $0x150] sm:$0xff]
  %v73 = vld [vmem:[%s1 + $0x158] sm:$0xff]
  %v74 = vld [vmem:[%s1 + $0x160] sm:$0xff]
  %v75 = vld [vmem:[%s1 + $0x168] sm:$0xff]
  %v76 = vld [vmem:[%s1 + $0x170] sm:$0xff]
  %v77 = vld [vmem:[%s1 + $0x178] sm:$0xff]
  %v78 = vld [vmem:[%s1 + $0x180] sm:$0xff]
  %v79 = vld [vmem:[%s1 + $0x188] sm:$0xff]
  %v80 = vld [vmem:[%s1 + $0x190] sm:$0xff]
  %v81 = vld [vmem:[%s1 + $0x198] sm:$0xff]
  %v82 = vld [vmem:[%s1 + $0x1a0] sm:$0xff]
  %v83 = vld [vmem:[%s1 + $0x1a8] sm:$0xff]
  %v84 = vld [vmem:[%s1 + $0x1b0] sm:$0xff]
  %v85 = vld [vmem:[%s1 + $0x1b8] sm:$0xff]
  %v86 = vld [vmem:[%s1 + $0x1c0] sm:$0xff]
  %v87 = vld [vmem:[%s1 + $0x1c8] sm:$0xff]
  %v88 = vld [vmem:[%s1 + $0x1d0] sm:$0xff]
  %v89 = vld [vmem:[%s1 + $0x1d8] sm:$0xff]
  %v90 = vld [vmem:[%s1 + $0x1e0] sm:$0xff]
  %v91 = vld [vmem:[%s1 + $0x1e8] sm:$0xff]
  %v92 = vld [vmem:[%s1 + $0x1f0] sm:$0xff]
  %v93 = vld [vmem:[%s1 + $0x1f8] sm:$0xff]
  %v94 = vld [vmem:[%s2] sm:$0xf]
  %v96 = vlaneseq
  %v97 = vshrl.u32 %v96, 7
  %v98 = vsub.s32 0, %v97
  %v99 = vrot.slane %v94, %v98
  %v100 = vlaneseq
  %v101 = vshrl.u32 %v100, 7
  %v102 = vsub.s32 1, %v101
  %v103 = vrot.slane %v94, %v102
  %v104 = vlaneseq
  %v105 = vshrl.u32 %v104, 7
  %v106 = vsub.s32 2, %v105
  %v107 = vrot.slane %v94, %v106
  %v108 = vlaneseq
  %v109 = vshrl.u32 %v108, 7
  %v110 = vsub.s32 3, %v109
  %v111 = vrot.slane %v94, %v110
  %116 = vmatprep.subr.mxu0 %v91
  %117 = vmatpush1.msra.mxu0 %v90
  %118 = vmatprep.subr.mxu0 %v87
  %119 = vmatpush1.msra.mxu0 %v86
  %120 = vmatprep.subr.mxu0 %v83
  %121 = vmatpush1.msra.mxu0 %v82
  %122 = vmatprep.subr.mxu0 %v79
  %123 = vmatpush1.msra.mxu0 %v78
  %124 = vmatprep.subr.mxu0 %v75
  %125 = vmatpush1.msra.mxu0 %v74
  %126 = vmatprep.subr.mxu0 %v71
  %127 = vmatpush1.msra.mxu0 %v70
  %128 = vmatprep.subr.mxu0 %v67
  %129 = vmatpush1.msra.mxu0 %v66
  %130 = vmatprep.subr.mxu0 %v63
  %131 = vmatpush1.msra.mxu0 %v62
  %132 = vmatprep.subr.mxu0 %v59
  %133 = vmatpush1.msra.mxu0 %v58
  %134 = vmatprep.subr.mxu0 %v55
  %135 = vmatpush1.msra.mxu0 %v54
  %136 = vmatprep.subr.mxu0 %v51
  %137 = vmatpush1.msra.mxu0 %v50
  %138 = vmatprep.subr.mxu0 %v47
  %139 = vmatpush1.msra.mxu0 %v46
  %140 = vmatprep.subr.mxu0 %v43
  %141 = vmatpush1.msra.mxu0 %v42
  %142 = vmatprep.subr.mxu0 %v39
  %143 = vmatpush1.msra.mxu0 %v38
  %144 = vmatprep.subr.mxu0 %v35
  %145 = vmatpush1.msra.mxu0 %v34
  %146 = vmatprep.subr.mxu0 %v31
  %147 = vmatpush1.msra.mxu0 %v30
  %148 = vmatprep.subr.mxu0 0.0
  %149 = vmatpush2.msra.mxu0 0.0
  %150 = vmatprep.subr.mxu0 0.0
  %151 = vmatpush2.msra.mxu0 0.0
  %152 = vmatprep.subr.mxu0 0.0
  %153 = vmatpush2.msra.mxu0 0.0
  %154 = vmatprep.subr.mxu0 0.0
  %155 = vmatpush2.msra.mxu0 0.0
  %156 = vmatprep.subr.mxu0 0.0
  %157 = vmatpush2.msra.mxu0 0.0
  %158 = vmatprep.subr.mxu0 0.0
  %159 = vmatpush2.msra.mxu0 0.0
  %160 = vmatprep.subr.mxu0 0.0
  %161 = vmatpush2.msra.mxu0 0.0
  %162 = vmatprep.subr.mxu0 0.0
  %163 = vmatpush2.msra.mxu0 0.0
  %164 = vmatprep.subr.mxu0 0.0
  %165 = vmatpush2.msra.mxu0 0.0
  %166 = vmatprep.subr.mxu0 0.0
  %167 = vmatpush2.msra.mxu0 0.0
  %168 = vmatprep.subr.mxu0 0.0
  %169 = vmatpush2.msra.mxu0 0.0
  %170 = vmatprep.subr.mxu0 0.0
  %171 = vmatpush2.msra.mxu0 0.0
  %172 = vmatprep.subr.mxu0 0.0
  %173 = vmatpush2.msra.mxu0 0.0
  %174 = vmatprep.subr.mxu0 0.0
  %175 = vmatpush2.msra.mxu0 0.0
  %176 = vmatprep.subr.mxu0 0.0
  %177 = vmatpush2.msra.mxu0 0.0
  %178 = vmatprep.subr.mxu0 0.0
  %179 = vmatpush2.msra.mxu0 0.0
  %180 = vmatprep.mubr.f32.mxu0 0.0
  %181 = vmatmul.mubr.f32.gmra.mxu0 %v26
  %v182 = vpop.f32.mrf.mxu0
  %v183 = vadd.f32 %v99, %v182
  %v184 = vpop.f32.mrf.mxu0
  %v185 = vadd.f32 %v103, %v184
  %186 = vmatprep.mubr.f32.mxu0 0.0
  %187 = vmatmul.mubr.f32.gmra.mxu0 %v27
  %v188 = vpop.f32.mrf.mxu0
  %v189 = vadd.f32 %v99, %v188
  %v190 = vpop.f32.mrf.mxu0
  %v191 = vadd.f32 %v103, %v190
  %192 = vmatprep.mubr.f32.mxu0 0.0
  %193 = vmatmul.mubr.f32.gmra.mxu0 %v28
  %v194 = vpop.f32.mrf.mxu0
  %v195 = vadd.f32 %v99, %v194
  %v196 = vpop.f32.mrf.mxu0
  %v197 = vadd.f32 %v103, %v196
  %198 = vmatprep.mubr.f32.mxu0 0.0
  %199 = vmatmul.mubr.f32.gmra.mxu0 %v29
  %v200 = vpop.f32.mrf.mxu0
  %v201 = vadd.f32 %v99, %v200
  %v202 = vpop.f32.mrf.mxu0
  %v203 = vadd.f32 %v103, %v202
  %204 = vdwg.mxu0
  %205 = vmatprep.subr.mxu0 %v93
  %206 = vmatpush1.msra.mxu0 %v92
  %207 = vmatprep.subr.mxu0 %v89
  %208 = vmatpush1.msra.mxu0 %v88
  %209 = vmatprep.subr.mxu0 %v85
  %210 = vmatpush1.msra.mxu0 %v84
  %211 = vmatprep.subr.mxu0 %v81
  %212 = vmatpush1.msra.mxu0 %v80
  %213 = vmatprep.subr.mxu0 %v77
  %214 = vmatpush1.msra.mxu0 %v76
  %215 = vmatprep.subr.mxu0 %v73
  %216 = vmatpush1.msra.mxu0 %v72
  %217 = vmatprep.subr.mxu0 %v69
  %218 = vmatpush1.msra.mxu0 %v68
  %219 = vmatprep.subr.mxu0 %v65
  %220 = vmatpush1.msra.mxu0 %v64
  %221 = vmatprep.subr.mxu0 %v61
  %222 = vmatpush1.msra.mxu0 %v60
  %223 = vmatprep.subr.mxu0 %v57
  %224 = vmatpush1.msra.mxu0 %v56
  %225 = vmatprep.subr.mxu0 %v53
  %226 = vmatpush1.msra.mxu0 %v52
  %227 = vmatprep.subr.mxu0 %v49
  %228 = vmatpush1.msra.mxu0 %v48
  %229 = vmatprep.subr.mxu0 %v45
  %230 = vmatpush1.msra.mxu0 %v44
  %231 = vmatprep.subr.mxu0 %v41
  %232 = vmatpush1.msra.mxu0 %v40
  %233 = vmatprep.subr.mxu0 %v37
  %234 = vmatpush1.msra.mxu0 %v36
  %235 = vmatprep.subr.mxu0 %v33
  %236 = vmatpush1.msra.mxu0 %v32
  %237 = vmatprep.subr.mxu0 0.0
  %238 = vmatpush2.msra.mxu0 0.0
  %239 = vmatprep.subr.mxu0 0.0
  %240 = vmatpush2.msra.mxu0 0.0
  %241 = vmatprep.subr.mxu0 0.0
  %242 = vmatpush2.msra.mxu0 0.0
  %243 = vmatprep.subr.mxu0 0.0
  %244 = vmatpush2.msra.mxu0 0.0
  %245 = vmatprep.subr.mxu0 0.0
  %246 = vmatpush2.msra.mxu0 0.0
  %247 = vmatprep.subr.mxu0 0.0
  %248 = vmatpush2.msra.mxu0 0.0
  %249 = vmatprep.subr.mxu0 0.0
  %250 = vmatpush2.msra.mxu0 0.0
  %251 = vmatprep.subr.mxu0 0.0
  %252 = vmatpush2.msra.mxu0 0.0
  %253 = vmatprep.subr.mxu0 0.0
  %254 = vmatpush2.msra.mxu0 0.0
  %255 = vmatprep.subr.mxu0 0.0
  %256 = vmatpush2.msra.mxu0 0.0
  %257 = vmatprep.subr.mxu0 0.0
  %258 = vmatpush2.msra.mxu0 0.0
  %259 = vmatprep.subr.mxu0 0.0
  %260 = vmatpush2.msra.mxu0 0.0
  %261 = vmatprep.subr.mxu0 0.0
  %262 = vmatpush2.msra.mxu0 0.0
  %263 = vmatprep.subr.mxu0 0.0
  %264 = vmatpush2.msra.mxu0 0.0
  %265 = vmatprep.subr.mxu0 0.0
  %266 = vmatpush2.msra.mxu0 0.0
  %267 = vmatprep.subr.mxu0 0.0
  %268 = vmatpush2.msra.mxu0 0.0
  %269 = vmatprep.mubr.f32.mxu0 0.0
  %270 = vmatmul.mubr.f32.gmra.mxu0 %v26
  %v271 = vpop.f32.mrf.mxu0
  %v272 = vadd.f32 %v107, %v271
  %v273 = vpop.f32.mrf.mxu0
  %v274 = vadd.f32 %v111, %v273
  %275 = vmatprep.mubr.f32.mxu0 0.0
  %276 = vmatmul.mubr.f32.gmra.mxu0 %v27
  %v277 = vpop.f32.mrf.mxu0
  %v278 = vadd.f32 %v107, %v277
  %v279 = vpop.f32.mrf.mxu0
  %v280 = vadd.f32 %v111, %v279
  %281 = vmatprep.mubr.f32.mxu0 0.0
  %282 = vmatmul.mubr.f32.gmra.mxu0 %v28
  %v283 = vpop.f32.mrf.mxu0
  %v284 = vadd.f32 %v107, %v283
  %v285 = vpop.f32.mrf.mxu0
  %v286 = vadd.f32 %v111, %v285
  %287 = vmatprep.mubr.f32.mxu0 0.0
  %288 = vmatmul.mubr.f32.gmra.mxu0 %v29
  %v289 = vpop.f32.mrf.mxu0
  %v290 = vadd.f32 %v107, %v289
  %v291 = vpop.f32.mrf.mxu0
  %v292 = vadd.f32 %v111, %v291
  %293 = vdwg.mxu0
  %v294 = vmax.f32 %v183, 0.0
  %v295 = vmax.f32 %v185, 0.0
  %v296 = vmax.f32 %v272, 0.0
  %v297 = vmax.f32 %v274, 0.0
  %v298 = vmax.f32 %v189, 0.0
  %v299 = vmax.f32 %v191, 0.0
  %v300 = vmax.f32 %v278, 0.0
  %v301 = vmax.f32 %v280, 0.0
  %v302 = vmax.f32 %v195, 0.0
  %v303 = vmax.f32 %v197, 0.0
  %v304 = vmax.f32 %v284, 0.0
  %v305 = vmax.f32 %v286, 0.0
  %v306 = vmax.f32 %v201, 0.0
  %v307 = vmax.f32 %v203, 0.0
  %v308 = vmax.f32 %v290, 0.0
  %v309 = vmax.f32 %v292, 0.0
  %v310 = vld [vmem:[%s3] sm:$0xff]
  %v311 = vld [vmem:[%s3 + $0x8] sm:$0xff]
  %v312 = vld [vmem:[%s3 + $0x10] sm:$0xff]
  %v313 = vld [vmem:[%s3 + $0x18] sm:$0xff]
  %v314 = vld [vmem:[%s3 + $0x20] sm:$0xff]
  %v315 = vld [vmem:[%s3 + $0x28] sm:$0xff]
  %v316 = vld [vmem:[%s3 + $0x30] sm:$0xff]
  %v317 = vld [vmem:[%s3 + $0x38] sm:$0xff]
  %v318 = vld [vmem:[%s3 + $0x40] sm:$0xff]
  %v319 = vld [vmem:[%s3 + $0x48] sm:$0xff]
  %v320 = vld [vmem:[%s3 + $0x50] sm:$0xff]
  %v321 = vld [vmem:[%s3 + $0x58] sm:$0xff]
  %v322 = vld [vmem:[%s3 + $0x60] sm:$0xff]
  %v323 = vld [vmem:[%s3 + $0x68] sm:$0xff]
  %v324 = vld [vmem:[%s3 + $0x70] sm:$0xff]
  %v325 = vld [vmem:[%s3 + $0x78] sm:$0xff]
  %v326 = vld [vmem:[%s3 + $0x80] sm:$0xff]
  %v327 = vld [vmem:[%s3 + $0x88] sm:$0xff]
  %v328 = vld [vmem:[%s3 + $0x90] sm:$0xff]
  %v329 = vld [vmem:[%s3 + $0x98] sm:$0xff]
  %v330 = vld [vmem:[%s3 + $0xa0] sm:$0xff]
  %v331 = vld [vmem:[%s3 + $0xa8] sm:$0xff]
  %v332 = vld [vmem:[%s3 + $0xb0] sm:$0xff]
  %v333 = vld [vmem:[%s3 + $0xb8] sm:$0xff]
  %v334 = vld [vmem:[%s3 + $0xc0] sm:$0xff]
  %v335 = vld [vmem:[%s3 + $0xc8] sm:$0xff]
  %v336 = vld [vmem:[%s3 + $0xd0] sm:$0xff]
  %v337 = vld [vmem:[%s3 + $0xd8] sm:$0xff]
  %v338 = vld [vmem:[%s3 + $0xe0] sm:$0xff]
  %v339 = vld [vmem:[%s3 + $0xe8] sm:$0xff]
  %v340 = vld [vmem:[%s3 + $0xf0] sm:$0xff]
  %v341 = vld [vmem:[%s3 + $0xf8] sm:$0xff]
  %v342 = vld [vmem:[%s3 + $0x100] sm:$0xff]
  %v343 = vld [vmem:[%s3 + $0x108] sm:$0xff]
  %v344 = vld [vmem:[%s3 + $0x110] sm:$0xff]
  %v345 = vld [vmem:[%s3 + $0x118] sm:$0xff]
  %v346 = vld [vmem:[%s3 + $0x120] sm:$0xff]
  %v347 = vld [vmem:[%s3 + $0x128] sm:$0xff]
  %v348 = vld [vmem:[%s3 + $0x130] sm:$0xff]
  %v349 = vld [vmem:[%s3 + $0x138] sm:$0xff]
  %v350 = vld [vmem:[%s3 + $0x140] sm:$0xff]
  %v351 = vld [vmem:[%s3 + $0x148] sm:$0xff]
  %v352 = vld [vmem:[%s3 + $0x150] sm:$0xff]
  %v353 = vld [vmem:[%s3 + $0x158] sm:$0xff]
  %v354 = vld [vmem:[%s3 + $0x160] sm:$0xff]
  %v355 = vld [vmem:[%s3 + $0x168] sm:$0xff]
  %v356 = vld [vmem:[%s3 + $0x170] sm:$0xff]
  %v357 = vld [vmem:[%s3 + $0x178] sm:$0xff]
  %v358 = vld [vmem:[%s3 + $0x180] sm:$0xff]
  %v359 = vld [vmem:[%s3 + $0x188] sm:$0xff]
  %v360 = vld [vmem:[%s3 + $0x190] sm:$0xff]
  %v361 = vld [vmem:[%s3 + $0x198] sm:$0xff]
  %v362 = vld [vmem:[%s3 + $0x1a0] sm:$0xff]
  %v363 = vld [vmem:[%s3 + $0x1a8] sm:$0xff]
  %v364 = vld [vmem:[%s3 + $0x1b0] sm:$0xff]
  %v365 = vld [vmem:[%s3 + $0x1b8] sm:$0xff]
  %v366 = vld [vmem:[%s3 + $0x1c0] sm:$0xff]
  %v367 = vld [vmem:[%s3 + $0x1c8] sm:$0xff]
  %v368 = vld [vmem:[%s3 + $0x1d0] sm:$0xff]
  %v369 = vld [vmem:[%s3 + $0x1d8] sm:$0xff]
  %v370 = vld [vmem:[%s3 + $0x1e0] sm:$0xff]
  %v371 = vld [vmem:[%s3 + $0x1e8] sm:$0xff]
  %v372 = vld [vmem:[%s3 + $0x1f0] sm:$0xff]
  %v373 = vld [vmem:[%s3 + $0x1f8] sm:$0xff]
  %v374 = vld [vmem:[%s3 + $0x200] sm:$0xff]
  %v375 = vld [vmem:[%s3 + $0x208] sm:$0xff]
  %v376 = vld [vmem:[%s3 + $0x210] sm:$0xff]
  %v377 = vld [vmem:[%s3 + $0x218] sm:$0xff]
  %v378 = vld [vmem:[%s3 + $0x220] sm:$0xff]
  %v379 = vld [vmem:[%s3 + $0x228] sm:$0xff]
  %v380 = vld [vmem:[%s3 + $0x230] sm:$0xff]
  %v381 = vld [vmem:[%s3 + $0x238] sm:$0xff]
  %v382 = vld [vmem:[%s3 + $0x240] sm:$0xff]
  %v383 = vld [vmem:[%s3 + $0x248] sm:$0xff]
  %v384 = vld [vmem:[%s3 + $0x250] sm:$0xff]
  %v385 = vld [vmem:[%s3 + $0x258] sm:$0xff]
  %v386 = vld [vmem:[%s3 + $0x260] sm:$0xff]
  %v387 = vld [vmem:[%s3 + $0x268] sm:$0xff]
  %v388 = vld [vmem:[%s3 + $0x270] sm:$0xff]
  %v389 = vld [vmem:[%s3 + $0x278] sm:$0xff]
  %v390 = vld [vmem:[%s3 + $0x280] sm:$0xff]
  %v391 = vld [vmem:[%s3 + $0x288] sm:$0xff]
  %v392 = vld [vmem:[%s3 + $0x290] sm:$0xff]
  %v393 = vld [vmem:[%s3 + $0x298] sm:$0xff]
  %v394 = vld [vmem:[%s3 + $0x2a0] sm:$0xff]
  %v395 = vld [vmem:[%s3 + $0x2a8] sm:$0xff]
  %v396 = vld [vmem:[%s3 + $0x2b0] sm:$0xff]
  %v397 = vld [vmem:[%s3 + $0x2b8] sm:$0xff]
  %v398 = vld [vmem:[%s3 + $0x2c0] sm:$0xff]
  %v399 = vld [vmem:[%s3 + $0x2c8] sm:$0xff]
  %v400 = vld [vmem:[%s3 + $0x2d0] sm:$0xff]
  %v401 = vld [vmem:[%s3 + $0x2d8] sm:$0xff]
  %v402 = vld [vmem:[%s3 + $0x2e0] sm:$0xff]
  %v403 = vld [vmem:[%s3 + $0x2e8] sm:$0xff]
  %v404 = vld [vmem:[%s3 + $0x2f0] sm:$0xff]
  %v405 = vld [vmem:[%s3 + $0x2f8] sm:$0xff]
  %v406 = vld [vmem:[%s3 + $0x300] sm:$0xff]
  %v407 = vld [vmem:[%s3 + $0x308] sm:$0xff]
  %v408 = vld [vmem:[%s3 + $0x310] sm:$0xff]
  %v409 = vld [vmem:[%s3 + $0x318] sm:$0xff]
  %v410 = vld [vmem:[%s3 + $0x320] sm:$0xff]
  %v411 = vld [vmem:[%s3 + $0x328] sm:$0xff]
  %v412 = vld [vmem:[%s3 + $0x330] sm:$0xff]
  %v413 = vld [vmem:[%s3 + $0x338] sm:$0xff]
  %v414 = vld [vmem:[%s3 + $0x340] sm:$0xff]
  %v415 = vld [vmem:[%s3 + $0x348] sm:$0xff]
  %v416 = vld [vmem:[%s3 + $0x350] sm:$0xff]
  %v417 = vld [vmem:[%s3 + $0x358] sm:$0xff]
  %v418 = vld [vmem:[%s3 + $0x360] sm:$0xff]
  %v419 = vld [vmem:[%s3 + $0x368] sm:$0xff]
  %v420 = vld [vmem:[%s3 + $0x370] sm:$0xff]
  %v421 = vld [vmem:[%s3 + $0x378] sm:$0xff]
  %v422 = vld [vmem:[%s3 + $0x380] sm:$0xff]
  %v423 = vld [vmem:[%s3 + $0x388] sm:$0xff]
  %v424 = vld [vmem:[%s3 + $0x390] sm:$0xff]
  %v425 = vld [vmem:[%s3 + $0x398] sm:$0xff]
  %v426 = vld [vmem:[%s3 + $0x3a0] sm:$0xff]
  %v427 = vld [vmem:[%s3 + $0x3a8] sm:$0xff]
  %v428 = vld [vmem:[%s3 + $0x3b0] sm:$0xff]
  %v429 = vld [vmem:[%s3 + $0x3b8] sm:$0xff]
  %v430 = vld [vmem:[%s3 + $0x3c0] sm:$0xff]
  %v431 = vld [vmem:[%s3 + $0x3c8] sm:$0xff]
  %v432 = vld [vmem:[%s3 + $0x3d0] sm:$0xff]
  %v433 = vld [vmem:[%s3 + $0x3d8] sm:$0xff]
  %v434 = vld [vmem:[%s3 + $0x3e0] sm:$0xff]
  %v435 = vld [vmem:[%s3 + $0x3e8] sm:$0xff]
  %v436 = vld [vmem:[%s3 + $0x3f0] sm:$0xff]
  %v437 = vld [vmem:[%s3 + $0x3f8] sm:$0xff]
  %v438 = vld [vmem:[%s3 + $0x400] sm:$0xff]
  %v439 = vld [vmem:[%s3 + $0x408] sm:$0xff]
  %v440 = vld [vmem:[%s3 + $0x410] sm:$0xff]
  %v441 = vld [vmem:[%s3 + $0x418] sm:$0xff]
  %v442 = vld [vmem:[%s3 + $0x420] sm:$0xff]
  %v443 = vld [vmem:[%s3 + $0x428] sm:$0xff]
  %v444 = vld [vmem:[%s3 + $0x430] sm:$0xff]
  %v445 = vld [vmem:[%s3 + $0x438] sm:$0xff]
  %v446 = vld [vmem:[%s3 + $0x440] sm:$0xff]
  %v447 = vld [vmem:[%s3 + $0x448] sm:$0xff]
  %v448 = vld [vmem:[%s3 + $0x450] sm:$0xff]
  %v449 = vld [vmem:[%s3 + $0x458] sm:$0xff]
  %v450 = vld [vmem:[%s3 + $0x460] sm:$0xff]
  %v451 = vld [vmem:[%s3 + $0x468] sm:$0xff]
  %v452 = vld [vmem:[%s3 + $0x470] sm:$0xff]
  %v453 = vld [vmem:[%s3 + $0x478] sm:$0xff]
  %v454 = vld [vmem:[%s3 + $0x480] sm:$0xff]
  %v455 = vld [vmem:[%s3 + $0x488] sm:$0xff]
  %v456 = vld [vmem:[%s3 + $0x490] sm:$0xff]
  %v457 = vld [vmem:[%s3 + $0x498] sm:$0xff]
  %v458 = vld [vmem:[%s3 + $0x4a0] sm:$0xff]
  %v459 = vld [vmem:[%s3 + $0x4a8] sm:$0xff]
  %v460 = vld [vmem:[%s3 + $0x4b0] sm:$0xff]
  %v461 = vld [vmem:[%s3 + $0x4b8] sm:$0xff]
  %v462 = vld [vmem:[%s3 + $0x4c0] sm:$0xff]
  %v463 = vld [vmem:[%s3 + $0x4c8] sm:$0xff]
  %v464 = vld [vmem:[%s3 + $0x4d0] sm:$0xff]
  %v465 = vld [vmem:[%s3 + $0x4d8] sm:$0xff]
  %v466 = vld [vmem:[%s3 + $0x4e0] sm:$0xff]
  %v467 = vld [vmem:[%s3 + $0x4e8] sm:$0xff]
  %v468 = vld [vmem:[%s3 + $0x4f0] sm:$0xff]
  %v469 = vld [vmem:[%s3 + $0x4f8] sm:$0xff]
  %v470 = vld [vmem:[%s3 + $0x500] sm:$0xff]
  %v471 = vld [vmem:[%s3 + $0x508] sm:$0xff]
  %v472 = vld [vmem:[%s3 + $0x510] sm:$0xff]
  %v473 = vld [vmem:[%s3 + $0x518] sm:$0xff]
  %v474 = vld [vmem:[%s3 + $0x520] sm:$0xff]
  %v475 = vld [vmem:[%s3 + $0x528] sm:$0xff]
  %v476 = vld [vmem:[%s3 + $0x530] sm:$0xff]
  %v477 = vld [vmem:[%s3 + $0x538] sm:$0xff]
  %v478 = vld [vmem:[%s3 + $0x540] sm:$0xff]
  %v479 = vld [vmem:[%s3 + $0x548] sm:$0xff]
  %v480 = vld [vmem:[%s3 + $0x550] sm:$0xff]
  %v481 = vld [vmem:[%s3 + $0x558] sm:$0xff]
  %v482 = vld [vmem:[%s3 + $0x560] sm:$0xff]
  %v483 = vld [vmem:[%s3 + $0x568] sm:$0xff]
  %v484 = vld [vmem:[%s3 + $0x570] sm:$0xff]
  %v485 = vld [vmem:[%s3 + $0x578] sm:$0xff]
  %v486 = vld [vmem:[%s3 + $0x580] sm:$0xff]
  %v487 = vld [vmem:[%s3 + $0x588] sm:$0xff]
  %v488 = vld [vmem:[%s3 + $0x590] sm:$0xff]
  %v489 = vld [vmem:[%s3 + $0x598] sm:$0xff]
  %v490 = vld [vmem:[%s3 + $0x5a0] sm:$0xff]
  %v491 = vld [vmem:[%s3 + $0x5a8] sm:$0xff]
  %v492 = vld [vmem:[%s3 + $0x5b0] sm:$0xff]
  %v493 = vld [vmem:[%s3 + $0x5b8] sm:$0xff]
  %v494 = vld [vmem:[%s3 + $0x5c0] sm:$0xff]
  %v495 = vld [vmem:[%s3 + $0x5c8] sm:$0xff]
  %v496 = vld [vmem:[%s3 + $0x5d0] sm:$0xff]
  %v497 = vld [vmem:[%s3 + $0x5d8] sm:$0xff]
  %v498 = vld [vmem:[%s3 + $0x5e0] sm:$0xff]
  %v499 = vld [vmem:[%s3 + $0x5e8] sm:$0xff]
  %v500 = vld [vmem:[%s3 + $0x5f0] sm:$0xff]
  %v501 = vld [vmem:[%s3 + $0x5f8] sm:$0xff]
  %v502 = vld [vmem:[%s3 + $0x600] sm:$0xff]
  %v503 = vld [vmem:[%s3 + $0x608] sm:$0xff]
  %v504 = vld [vmem:[%s3 + $0x610] sm:$0xff]
  %v505 = vld [vmem:[%s3 + $0x618] sm:$0xff]
  %v506 = vld [vmem:[%s3 + $0x620] sm:$0xff]
  %v507 = vld [vmem:[%s3 + $0x628] sm:$0xff]
  %v508 = vld [vmem:[%s3 + $0x630] sm:$0xff]
  %v509 = vld [vmem:[%s3 + $0x638] sm:$0xff]
  %v510 = vld [vmem:[%s3 + $0x640] sm:$0xff]
  %v511 = vld [vmem:[%s3 + $0x648] sm:$0xff]
  %v512 = vld [vmem:[%s3 + $0x650] sm:$0xff]
  %v513 = vld [vmem:[%s3 + $0x658] sm:$0xff]
  %v514 = vld [vmem:[%s3 + $0x660] sm:$0xff]
  %v515 = vld [vmem:[%s3 + $0x668] sm:$0xff]
  %v516 = vld [vmem:[%s3 + $0x670] sm:$0xff]
  %v517 = vld [vmem:[%s3 + $0x678] sm:$0xff]
  %v518 = vld [vmem:[%s3 + $0x680] sm:$0xff]
  %v519 = vld [vmem:[%s3 + $0x688] sm:$0xff]
  %v520 = vld [vmem:[%s3 + $0x690] sm:$0xff]
  %v521 = vld [vmem:[%s3 + $0x698] sm:$0xff]
  %v522 = vld [vmem:[%s3 + $0x6a0] sm:$0xff]
  %v523 = vld [vmem:[%s3 + $0x6a8] sm:$0xff]
  %v524 = vld [vmem:[%s3 + $0x6b0] sm:$0xff]
  %v525 = vld [vmem:[%s3 + $0x6b8] sm:$0xff]
  %v526 = vld [vmem:[%s3 + $0x6c0] sm:$0xff]
  %v527 = vld [vmem:[%s3 + $0x6c8] sm:$0xff]
  %v528 = vld [vmem:[%s3 + $0x6d0] sm:$0xff]
  %v529 = vld [vmem:[%s3 + $0x6d8] sm:$0xff]
  %v530 = vld [vmem:[%s3 + $0x6e0] sm:$0xff]
  %v531 = vld [vmem:[%s3 + $0x6e8] sm:$0xff]
  %v532 = vld [vmem:[%s3 + $0x6f0] sm:$0xff]
  %v533 = vld [vmem:[%s3 + $0x6f8] sm:$0xff]
  %v534 = vld [vmem:[%s3 + $0x700] sm:$0xff]
  %v535 = vld [vmem:[%s3 + $0x708] sm:$0xff]
  %v536 = vld [vmem:[%s3 + $0x710] sm:$0xff]
  %v537 = vld [vmem:[%s3 + $0x718] sm:$0xff]
  %v538 = vld [vmem:[%s3 + $0x720] sm:$0xff]
  %v539 = vld [vmem:[%s3 + $0x728] sm:$0xff]
  %v540 = vld [vmem:[%s3 + $0x730] sm:$0xff]
  %v541 = vld [vmem:[%s3 + $0x738] sm:$0xff]
  %v542 = vld [vmem:[%s3 + $0x740] sm:$0xff]
  %v543 = vld [vmem:[%s3 + $0x748] sm:$0xff]
  %v544 = vld [vmem:[%s3 + $0x750] sm:$0xff]
  %v545 = vld [vmem:[%s3 + $0x758] sm:$0xff]
  %v546 = vld [vmem:[%s3 + $0x760] sm:$0xff]
  %v547 = vld [vmem:[%s3 + $0x768] sm:$0xff]
  %v548 = vld [vmem:[%s3 + $0x770] sm:$0xff]
  %v549 = vld [vmem:[%s3 + $0x778] sm:$0xff]
  %v550 = vld [vmem:[%s3 + $0x780] sm:$0xff]
  %v551 = vld [vmem:[%s3 + $0x788] sm:$0xff]
  %v552 = vld [vmem:[%s3 + $0x790] sm:$0xff]
  %v553 = vld [vmem:[%s3 + $0x798] sm:$0xff]
  %v554 = vld [vmem:[%s3 + $0x7a0] sm:$0xff]
  %v555 = vld [vmem:[%s3 + $0x7a8] sm:$0xff]
  %v556 = vld [vmem:[%s3 + $0x7b0] sm:$0xff]
  %v557 = vld [vmem:[%s3 + $0x7b8] sm:$0xff]
  %v558 = vld [vmem:[%s3 + $0x7c0] sm:$0xff]
  %v559 = vld [vmem:[%s3 + $0x7c8] sm:$0xff]
  %v560 = vld [vmem:[%s3 + $0x7d0] sm:$0xff]
  %v561 = vld [vmem:[%s3 + $0x7d8] sm:$0xff]
  %v562 = vld [vmem:[%s3 + $0x7e0] sm:$0xff]
  %v563 = vld [vmem:[%s3 + $0x7e8] sm:$0xff]
  %v564 = vld [vmem:[%s3 + $0x7f0] sm:$0xff]
  %v565 = vld [vmem:[%s3 + $0x7f8] sm:$0xff]
  %v566 = vld [vmem:[%s4] sm:$0xf]
  %v568 = vlaneseq
  %v569 = vshrl.u32 %v568, 7
  %v570 = vsub.s32 0, %v569
  %v571 = vrot.slane %v566, %v570
  %v572 = vlaneseq
  %v573 = vshrl.u32 %v572, 7
  %v574 = vsub.s32 1, %v573
  %v575 = vrot.slane %v566, %v574
  %v576 = vlaneseq
  %v577 = vshrl.u32 %v576, 7
  %v578 = vsub.s32 2, %v577
  %v579 = vrot.slane %v566, %v578
  %v580 = vlaneseq
  %v581 = vshrl.u32 %v580, 7
  %v582 = vsub.s32 3, %v581
  %v583 = vrot.slane %v566, %v582
  %588 = vmatprep.subr.mxu0 %v371
  %589 = vmatpush1.msra.mxu0 %v370
  %590 = vmatprep.subr.mxu0 %v367
  %591 = vmatpush1.msra.mxu0 %v366
  %592 = vmatprep.subr.mxu0 %v363
  %593 = vmatpush1.msra.mxu0 %v362
  %594 = vmatprep.subr.mxu0 %v359
  %595 = vmatpush1.msra.mxu0 %v358
  %596 = vmatprep.subr.mxu0 %v355
  %597 = vmatpush1.msra.mxu0 %v354
  %598 = vmatprep.subr.mxu0 %v351
  %599 = vmatpush1.msra.mxu0 %v350
  %600 = vmatprep.subr.mxu0 %v347
  %601 = vmatpush1.msra.mxu0 %v346
  %602 = vmatprep.subr.mxu0 %v343
  %603 = vmatpush1.msra.mxu0 %v342
  %604 = vmatprep.subr.mxu0 %v339
  %605 = vmatpush1.msra.mxu0 %v338
  %606 = vmatprep.subr.mxu0 %v335
  %607 = vmatpush1.msra.mxu0 %v334
  %608 = vmatprep.subr.mxu0 %v331
  %609 = vmatpush1.msra.mxu0 %v330
  %610 = vmatprep.subr.mxu0 %v327
  %611 = vmatpush1.msra.mxu0 %v326
  %612 = vmatprep.subr.mxu0 %v323
  %613 = vmatpush1.msra.mxu0 %v322
  %614 = vmatprep.subr.mxu0 %v319
  %615 = vmatpush1.msra.mxu0 %v318
  %616 = vmatprep.subr.mxu0 %v315
  %617 = vmatpush1.msra.mxu0 %v314
  %618 = vmatprep.subr.mxu0 %v311
  %619 = vmatpush1.msra.mxu0 %v310
  %620 = vmatprep.subr.mxu0 %v435
  %621 = vmatpush2.msra.mxu0 %v434
  %622 = vmatprep.subr.mxu0 %v431
  %623 = vmatpush2.msra.mxu0 %v430
  %624 = vmatprep.subr.mxu0 %v427
  %625 = vmatpush2.msra.mxu0 %v426
  %626 = vmatprep.subr.mxu0 %v423
  %627 = vmatpush2.msra.mxu0 %v422
  %628 = vmatprep.subr.mxu0 %v419
  %629 = vmatpush2.msra.mxu0 %v418
  %630 = vmatprep.subr.mxu0 %v415
  %631 = vmatpush2.msra.mxu0 %v414
  %632 = vmatprep.subr.mxu0 %v411
  %633 = vmatpush2.msra.mxu0 %v410
  %634 = vmatprep.subr.mxu0 %v407
  %635 = vmatpush2.msra.mxu0 %v406
  %636 = vmatprep.subr.mxu0 %v403
  %637 = vmatpush2.msra.mxu0 %v402
  %638 = vmatprep.subr.mxu0 %v399
  %639 = vmatpush2.msra.mxu0 %v398
  %640 = vmatprep.subr.mxu0 %v395
  %641 = vmatpush2.msra.mxu0 %v394
  %642 = vmatprep.subr.mxu0 %v391
  %643 = vmatpush2.msra.mxu0 %v390
  %644 = vmatprep.subr.mxu0 %v387
  %645 = vmatpush2.msra.mxu0 %v386
  %646 = vmatprep.subr.mxu0 %v383
  %647 = vmatpush2.msra.mxu0 %v382
  %648 = vmatprep.subr.mxu0 %v379
  %649 = vmatpush2.msra.mxu0 %v378
  %650 = vmatprep.subr.mxu0 %v375
  %651 = vmatpush2.msra.mxu0 %v374
  %652 = vmatprep.mubr.f32.mxu0 %v295
  %653 = vmatmul.mubr.f32.gmra.mxu0 %v294
  %v654 = vpop.f32.mrf.mxu0
  %v655 = vadd.f32 %v571, %v654
  %v656 = vpop.f32.mrf.mxu0
  %v657 = vadd.f32 %v575, %v656
  %658 = vmatprep.mubr.f32.mxu0 %v299
  %659 = vmatmul.mubr.f32.gmra.mxu0 %v298
  %v660 = vpop.f32.mrf.mxu0
  %v661 = vadd.f32 %v571, %v660
  %v662 = vpop.f32.mrf.mxu0
  %v663 = vadd.f32 %v575, %v662
  %664 = vmatprep.mubr.f32.mxu0 %v303
  %665 = vmatmul.mubr.f32.gmra.mxu0 %v302
  %v666 = vpop.f32.mrf.mxu0
  %v667 = vadd.f32 %v571, %v666
  %v668 = vpop.f32.mrf.mxu0
  %v669 = vadd.f32 %v575, %v668
  %670 = vmatprep.mubr.f32.mxu0 %v307
  %671 = vmatmul.mubr.f32.gmra.mxu0 %v306
  %v672 = vpop.f32.mrf.mxu0
  %v673 = vadd.f32 %v571, %v672
  %v674 = vpop.f32.mrf.mxu0
  %v675 = vadd.f32 %v575, %v674
  %676 = vdwg.mxu0
  %677 = vmatprep.subr.mxu0 %v499
  %678 = vmatpush1.msra.mxu0 %v498
  %679 = vmatprep.subr.mxu0 %v495
  %680 = vmatpush1.msra.mxu0 %v494
  %681 = vmatprep.subr.mxu0 %v491
  %682 = vmatpush1.msra.mxu0 %v490
  %683 = vmatprep.subr.mxu0 %v487
  %684 = vmatpush1.msra.mxu0 %v486
  %685 = vmatprep.subr.mxu0 %v483
  %686 = vmatpush1.msra.mxu0 %v482
  %687 = vmatprep.subr.mxu0 %v479
  %688 = vmatpush1.msra.mxu0 %v478
  %689 = vmatprep.subr.mxu0 %v475
  %690 = vmatpush1.msra.mxu0 %v474
  %691 = vmatprep.subr.mxu0 %v471
  %692 = vmatpush1.msra.mxu0 %v470
  %693 = vmatprep.subr.mxu0 %v467
  %694 = vmatpush1.msra.mxu0 %v466
  %695 = vmatprep.subr.mxu0 %v463
  %696 = vmatpush1.msra.mxu0 %v462
  %697 = vmatprep.subr.mxu0 %v459
  %698 = vmatpush1.msra.mxu0 %v458
  %699 = vmatprep.subr.mxu0 %v455
  %700 = vmatpush1.msra.mxu0 %v454
  %701 = vmatprep.subr.mxu0 %v451
  %702 = vmatpush1.msra.mxu0 %v450
  %703 = vmatprep.subr.mxu0 %v447
  %704 = vmatpush1.msra.mxu0 %v446
  %705 = vmatprep.subr.mxu0 %v443
  %706 = vmatpush1.msra.mxu0 %v442
  %707 = vmatprep.subr.mxu0 %v439
  %708 = vmatpush1.msra.mxu0 %v438
  %709 = vmatprep.subr.mxu0 %v563
  %710 = vmatpush2.msra.mxu0 %v562
  %711 = vmatprep.subr.mxu0 %v559
  %712 = vmatpush2.msra.mxu0 %v558
  %713 = vmatprep.subr.mxu0 %v555
  %714 = vmatpush2.msra.mxu0 %v554
  %715 = vmatprep.subr.mxu0 %v551
  %716 = vmatpush2.msra.mxu0 %v550
  %717 = vmatprep.subr.mxu0 %v547
  %718 = vmatpush2.msra.mxu0 %v546
  %719 = vmatprep.subr.mxu0 %v543
  %720 = vmatpush2.msra.mxu0 %v542
  %721 = vmatprep.subr.mxu0 %v539
  %722 = vmatpush2.msra.mxu0 %v538
  %723 = vmatprep.subr.mxu0 %v535
  %724 = vmatpush2.msra.mxu0 %v534
  %725 = vmatprep.subr.mxu0 %v531
  %726 = vmatpush2.msra.mxu0 %v530
  %727 = vmatprep.subr.mxu0 %v527
  %728 = vmatpush2.msra.mxu0 %v526
  %729 = vmatprep.subr.mxu0 %v523
  %730 = vmatpush2.msra.mxu0 %v522
  %731 = vmatprep.subr.mxu0 %v519
  %732 = vmatpush2.msra.mxu0 %v518
  %733 = vmatprep.subr.mxu0 %v515
  %734 = vmatpush2.msra.mxu0 %v514
  %735 = vmatprep.subr.mxu0 %v511
  %736 = vmatpush2.msra.mxu0 %v510
  %737 = vmatprep.subr.mxu0 %v507
  %738 = vmatpush2.msra.mxu0 %v506
  %739 = vmatprep.subr.mxu0 %v503
  %740 = vmatpush2.msra.mxu0 %v502
  %741 = vmatprep.mubr.f32.mxu0 %v297
  %742 = vmatmul.mubr.f32.gmra.mxu0 %v296
  %v743 = vpop.f32.mrf.mxu0
  %v744 = vadd.f32 %v655, %v743
  %v745 = vpop.f32.mrf.mxu0
  %v746 = vadd.f32 %v657, %v745
  %747 = vmatprep.mubr.f32.mxu0 %v301
  %748 = vmatmul.mubr.f32.gmra.mxu0 %v300
  %v749 = vpop.f32.mrf.mxu0
  %v750 = vadd.f32 %v661, %v749
  %v751 = vpop.f32.mrf.mxu0
  %v752 = vadd.f32 %v663, %v751
  %753 = vmatprep.mubr.f32.mxu0 %v305
  %754 = vmatmul.mubr.f32.gmra.mxu0 %v304
  %v755 = vpop.f32.mrf.mxu0
  %v756 = vadd.f32 %v667, %v755
  %v757 = vpop.f32.mrf.mxu0
  %v758 = vadd.f32 %v669, %v757
  %759 = vmatprep.mubr.f32.mxu0 %v309
  %760 = vmatmul.mubr.f32.gmra.mxu0 %v308
  %v761 = vpop.f32.mrf.mxu0
  %v762 = vadd.f32 %v673, %v761
  %v763 = vpop.f32.mrf.mxu0
  %v764 = vadd.f32 %v675, %v763
  %765 = vdwg.mxu0
  %766 = vmatprep.subr.mxu0 %v373
  %767 = vmatpush1.msra.mxu0 %v372
  %768 = vmatprep.subr.mxu0 %v369
  %769 = vmatpush1.msra.mxu0 %v368
  %770 = vmatprep.subr.mxu0 %v365
  %771 = vmatpush1.msra.mxu0 %v364
  %772 = vmatprep.subr.mxu0 %v361
  %773 = vmatpush1.msra.mxu0 %v360
  %774 = vmatprep.subr.mxu0 %v357
  %775 = vmatpush1.msra.mxu0 %v356
  %776 = vmatprep.subr.mxu0 %v353
  %777 = vmatpush1.msra.mxu0 %v352
  %778 = vmatprep.subr.mxu0 %v349
  %779 = vmatpush1.msra.mxu0 %v348
  %780 = vmatprep.subr.mxu0 %v345
  %781 = vmatpush1.msra.mxu0 %v344
  %782 = vmatprep.subr.mxu0 %v341
  %783 = vmatpush1.msra.mxu0 %v340
  %784 = vmatprep.subr.mxu0 %v337
  %785 = vmatpush1.msra.mxu0 %v336
  %786 = vmatprep.subr.mxu0 %v333
  %787 = vmatpush1.msra.mxu0 %v332
  %788 = vmatprep.subr.mxu0 %v329
  %789 = vmatpush1.msra.mxu0 %v328
  %790 = vmatprep.subr.mxu0 %v325
  %791 = vmatpush1.msra.mxu0 %v324
  %792 = vmatprep.subr.mxu0 %v321
  %793 = vmatpush1.msra.mxu0 %v320
  %794 = vmatprep.subr.mxu0 %v317
  %795 = vmatpush1.msra.mxu0 %v316
  %796 = vmatprep.subr.mxu0 %v313
  %797 = vmatpush1.msra.mxu0 %v312
  %798 = vmatprep.subr.mxu0 %v437
  %799 = vmatpush2.msra.mxu0 %v436
  %800 = vmatprep.subr.mxu0 %v433
  %801 = vmatpush2.msra.mxu0 %v432
  %802 = vmatprep.subr.mxu0 %v429
  %803 = vmatpush2.msra.mxu0 %v428
  %804 = vmatprep.subr.mxu0 %v425
  %805 = vmatpush2.msra.mxu0 %v424
  %806 = vmatprep.subr.mxu0 %v421
  %807 = vmatpush2.msra.mxu0 %v420
  %808 = vmatprep.subr.mxu0 %v417
  %809 = vmatpush2.msra.mxu0 %v416
  %810 = vmatprep.subr.mxu0 %v413
  %811 = vmatpush2.msra.mxu0 %v412
  %812 = vmatprep.subr.mxu0 %v409
  %813 = vmatpush2.msra.mxu0 %v408
  %814 = vmatprep.subr.mxu0 %v405
  %815 = vmatpush2.msra.mxu0 %v404
  %816 = vmatprep.subr.mxu0 %v401
  %817 = vmatpush2.msra.mxu0 %v400
  %818 = vmatprep.subr.mxu0 %v397
  %819 = vmatpush2.msra.mxu0 %v396
  %820 = vmatprep.subr.mxu0 %v393
  %821 = vmatpush2.msra.mxu0 %v392
  %822 = vmatprep.subr.mxu0 %v389
  %823 = vmatpush2.msra.mxu0 %v388
  %824 = vmatprep.subr.mxu0 %v385
  %825 = vmatpush2.msra.mxu0 %v384
  %826 = vmatprep.subr.mxu0 %v381
  %827 = vmatpush2.msra.mxu0 %v380
  %828 = vmatprep.subr.mxu0 %v377
  %829 = vmatpush2.msra.mxu0 %v376
  %830 = vmatprep.mubr.f32.mxu0 %v295
  %831 = vmatmul.mubr.f32.gmra.mxu0 %v294
  %v832 = vpop.f32.mrf.mxu0
  %v833 = vadd.f32 %v579, %v832
  %v834 = vpop.f32.mrf.mxu0
  %v835 = vadd.f32 %v583, %v834
  %836 = vmatprep.mubr.f32.mxu0 %v299
  %837 = vmatmul.mubr.f32.gmra.mxu0 %v298
  %v838 = vpop.f32.mrf.mxu0
  %v839 = vadd.f32 %v579, %v838
  %v840 = vpop.f32.mrf.mxu0
  %v841 = vadd.f32 %v583, %v840
  %842 = vmatprep.mubr.f32.mxu0 %v303
  %843 = vmatmul.mubr.f32.gmra.mxu0 %v302
  %v844 = vpop.f32.mrf.mxu0
  %v845 = vadd.f32 %v579, %v844
  %v846 = vpop.f32.mrf.mxu0
  %v847 = vadd.f32 %v583, %v846
  %848 = vmatprep.mubr.f32.mxu0 %v307
  %849 = vmatmul.mubr.f32.gmra.mxu0 %v306
  %v850 = vpop.f32.mrf.mxu0
  %v851 = vadd.f32 %v579, %v850
  %v852 = vpop.f32.mrf.mxu0
  %v853 = vadd.f32 %v583, %v852
  %854 = vdwg.mxu0
  %855 = vmatprep.subr.mxu0 %v501
  %856 = vmatpush1.msra.mxu0 %v500
  %857 = vmatprep.subr.mxu0 %v497
  %858 = vmatpush1.msra.mxu0 %v496
  %859 = vmatprep.subr.mxu0 %v493
  %860 = vmatpush1.msra.mxu0 %v492
  %861 = vmatprep.subr.mxu0 %v489
  %862 = vmatpush1.msra.mxu0 %v488
  %863 = vmatprep.subr.mxu0 %v485
  %864 = vmatpush1.msra.mxu0 %v484
  %865 = vmatprep.subr.mxu0 %v481
  %866 = vmatpush1.msra.mxu0 %v480
  %867 = vmatprep.subr.mxu0 %v477
  %868 = vmatpush1.msra.mxu0 %v476
  %869 = vmatprep.subr.mxu0 %v473
  %870 = vmatpush1.msra.mxu0 %v472
  %871 = vmatprep.subr.mxu0 %v469
  %872 = vmatpush1.msra.mxu0 %v468
  %873 = vmatprep.subr.mxu0 %v465
  %874 = vmatpush1.msra.mxu0 %v464
  %875 = vmatprep.subr.mxu0 %v461
  %876 = vmatpush1.msra.mxu0 %v460
  %877 = vmatprep.subr.mxu0 %v457
  %878 = vmatpush1.msra.mxu0 %v456
  %879 = vmatprep.subr.mxu0 %v453
  %880 = vmatpush1.msra.mxu0 %v452
  %881 = vmatprep.subr.mxu0 %v449
  %882 = vmatpush1.msra.mxu0 %v448
  %883 = vmatprep.subr.mxu0 %v445
  %884 = vmatpush1.msra.mxu0 %v444
  %885 = vmatprep.subr.mxu0 %v441
  %886 = vmatpush1.msra.mxu0 %v440
  %887 = vmatprep.subr.mxu0 %v565
  %888 = vmatpush2.msra.mxu0 %v564
  %889 = vmatprep.subr.mxu0 %v561
  %890 = vmatpush2.msra.mxu0 %v560
  %891 = vmatprep.subr.mxu0 %v557
  %892 = vmatpush2.msra.mxu0 %v556
  %893 = vmatprep.subr.mxu0 %v553
  %894 = vmatpush2.msra.mxu0 %v552
  %895 = vmatprep.subr.mxu0 %v549
  %896 = vmatpush2.msra.mxu0 %v548
  %897 = vmatprep.subr.mxu0 %v545
  %898 = vmatpush2.msra.mxu0 %v544
  %899 = vmatprep.subr.mxu0 %v541
  %900 = vmatpush2.msra.mxu0 %v540
  %901 = vmatprep.subr.mxu0 %v537
  %902 = vmatpush2.msra.mxu0 %v536
  %903 = vmatprep.subr.mxu0 %v533
  %904 = vmatpush2.msra.mxu0 %v532
  %905 = vmatprep.subr.mxu0 %v529
  %906 = vmatpush2.msra.mxu0 %v528
  %907 = vmatprep.subr.mxu0 %v525
  %908 = vmatpush2.msra.mxu0 %v524
  %909 = vmatprep.subr.mxu0 %v521
  %910 = vmatpush2.msra.mxu0 %v520
  %911 = vmatprep.subr.mxu0 %v517
  %912 = vmatpush2.msra.mxu0 %v516
  %913 = vmatprep.subr.mxu0 %v513
  %914 = vmatpush2.msra.mxu0 %v512
  %915 = vmatprep.subr.mxu0 %v509
  %916 = vmatpush2.msra.mxu0 %v508
  %917 = vmatprep.subr.mxu0 %v505
  %918 = vmatpush2.msra.mxu0 %v504
  %919 = vmatprep.mubr.f32.mxu0 %v297
  %920 = vmatmul.mubr.f32.gmra.mxu0 %v296
  %v921 = vpop.f32.mrf.mxu0
  %v922 = vadd.f32 %v833, %v921
  %v923 = vpop.f32.mrf.mxu0
  %v924 = vadd.f32 %v835, %v923
  %925 = vmatprep.mubr.f32.mxu0 %v301
  %926 = vmatmul.mubr.f32.gmra.mxu0 %v300
  %v927 = vpop.f32.mrf.mxu0
  %v928 = vadd.f32 %v839, %v927
  %v929 = vpop.f32.mrf.mxu0
  %v930 = vadd.f32 %v841, %v929
  %931 = vmatprep.mubr.f32.mxu0 %v305
  %932 = vmatmul.mubr.f32.gmra.mxu0 %v304
  %v933 = vpop.f32.mrf.mxu0
  %v934 = vadd.f32 %v845, %v933
  %v935 = vpop.f32.mrf.mxu0
  %v936 = vadd.f32 %v847, %v935
  %937 = vmatprep.mubr.f32.mxu0 %v309
  %938 = vmatmul.mubr.f32.gmra.mxu0 %v308
  %v939 = vpop.f32.mrf.mxu0
  %v940 = vadd.f32 %v851, %v939
  %v941 = vpop.f32.mrf.mxu0
  %v942 = vadd.f32 %v853, %v941
  %943 = vdwg.mxu0
  %v944 = vmax.f32 %v744, 0.0
  %v945 = vmax.f32 %v746, 0.0
  %v946 = vmax.f32 %v922, 0.0
  %v947 = vmax.f32 %v924, 0.0
  %v948 = vmax.f32 %v750, 0.0
  %v949 = vmax.f32 %v752, 0.0
  %v950 = vmax.f32 %v928, 0.0
  %v951 = vmax.f32 %v930, 0.0
  %v952 = vmax.f32 %v756, 0.0
  %v953 = vmax.f32 %v758, 0.0
  %v954 = vmax.f32 %v934, 0.0
  %v955 = vmax.f32 %v936, 0.0
  %v956 = vmax.f32 %v762, 0.0
  %v957 = vmax.f32 %v764, 0.0
  %v958 = vmax.f32 %v940, 0.0
  %v959 = vmax.f32 %v942, 0.0
  %v960 = vld [vmem:[%s5] sm:$0xff]
  %v961 = vld [vmem:[%s5 + $0x8] sm:$0xff]
  %v962 = vld [vmem:[%s5 + $0x10] sm:$0xff]
  %v963 = vld [vmem:[%s5 + $0x18] sm:$0xff]
  %v964 = vld [vmem:[%s5 + $0x20] sm:$0xff]
  %v965 = vld [vmem:[%s5 + $0x28] sm:$0xff]
  %v966 = vld [vmem:[%s5 + $0x30] sm:$0xff]
  %v967 = vld [vmem:[%s5 + $0x38] sm:$0xff]
  %v968 = vld [vmem:[%s5 + $0x40] sm:$0xff]
  %v969 = vld [vmem:[%s5 + $0x48] sm:$0xff]
  %v970 = vld [vmem:[%s5 + $0x50] sm:$0xff]
  %v971 = vld [vmem:[%s5 + $0x58] sm:$0xff]
  %v972 = vld [vmem:[%s5 + $0x60] sm:$0xff]
  %v973 = vld [vmem:[%s5 + $0x68] sm:$0xff]
  %v974 = vld [vmem:[%s5 + $0x70] sm:$0xff]
  %v975 = vld [vmem:[%s5 + $0x78] sm:$0xff]
  %v976 = vld [vmem:[%s5 + $0x80] sm:$0xff]
  %v977 = vld [vmem:[%s5 + $0x88] sm:$0xff]
  %v978 = vld [vmem:[%s5 + $0x90] sm:$0xff]
  %v979 = vld [vmem:[%s5 + $0x98] sm:$0xff]
  %v980 = vld [vmem:[%s5 + $0xa0] sm:$0xff]
  %v981 = vld [vmem:[%s5 + $0xa8] sm:$0xff]
  %v982 = vld [vmem:[%s5 + $0xb0] sm:$0xff]
  %v983 = vld [vmem:[%s5 + $0xb8] sm:$0xff]
  %v984 = vld [vmem:[%s5 + $0xc0] sm:$0xff]
  %v985 = vld [vmem:[%s5 + $0xc8] sm:$0xff]
  %v986 = vld [vmem:[%s5 + $0xd0] sm:$0xff]
  %v987 = vld [vmem:[%s5 + $0xd8] sm:$0xff]
  %v988 = vld [vmem:[%s5 + $0xe0] sm:$0xff]
  %v989 = vld [vmem:[%s5 + $0xe8] sm:$0xff]
  %v990 = vld [vmem:[%s5 + $0xf0] sm:$0xff]
  %v991 = vld [vmem:[%s5 + $0xf8] sm:$0xff]
  %v992 = vld [vmem:[%s5 + $0x100] sm:$0xff]
  %v993 = vld [vmem:[%s5 + $0x108] sm:$0xff]
  %v994 = vld [vmem:[%s5 + $0x110] sm:$0xff]
  %v995 = vld [vmem:[%s5 + $0x118] sm:$0xff]
  %v996 = vld [vmem:[%s5 + $0x120] sm:$0xff]
  %v997 = vld [vmem:[%s5 + $0x128] sm:$0xff]
  %v998 = vld [vmem:[%s5 + $0x130] sm:$0xff]
  %v999 = vld [vmem:[%s5 + $0x138] sm:$0xff]
  %v1000 = vld [vmem:[%s5 + $0x140] sm:$0xff]
  %v1001 = vld [vmem:[%s5 + $0x148] sm:$0xff]
  %v1002 = vld [vmem:[%s5 + $0x150] sm:$0xff]
  %v1003 = vld [vmem:[%s5 + $0x158] sm:$0xff]
  %v1004 = vld [vmem:[%s5 + $0x160] sm:$0xff]
  %v1005 = vld [vmem:[%s5 + $0x168] sm:$0xff]
  %v1006 = vld [vmem:[%s5 + $0x170] sm:$0xff]
  %v1007 = vld [vmem:[%s5 + $0x178] sm:$0xff]
  %v1008 = vld [vmem:[%s5 + $0x180] sm:$0xff]
  %v1009 = vld [vmem:[%s5 + $0x188] sm:$0xff]
  %v1010 = vld [vmem:[%s5 + $0x190] sm:$0xff]
  %v1011 = vld [vmem:[%s5 + $0x198] sm:$0xff]
  %v1012 = vld [vmem:[%s5 + $0x1a0] sm:$0xff]
  %v1013 = vld [vmem:[%s5 + $0x1a8] sm:$0xff]
  %v1014 = vld [vmem:[%s5 + $0x1b0] sm:$0xff]
  %v1015 = vld [vmem:[%s5 + $0x1b8] sm:$0xff]
  %v1016 = vld [vmem:[%s5 + $0x1c0] sm:$0xff]
  %v1017 = vld [vmem:[%s5 + $0x1c8] sm:$0xff]
  %v1018 = vld [vmem:[%s5 + $0x1d0] sm:$0xff]
  %v1019 = vld [vmem:[%s5 + $0x1d8] sm:$0xff]
  %v1020 = vld [vmem:[%s5 + $0x1e0] sm:$0xff]
  %v1021 = vld [vmem:[%s5 + $0x1e8] sm:$0xff]
  %v1022 = vld [vmem:[%s5 + $0x1f0] sm:$0xff]
  %v1023 = vld [vmem:[%s5 + $0x1f8] sm:$0xff]
  %v1024 = vld [vmem:[%s6] sm:$0x1]
  %v1026 = vlaneseq
  %v1027 = vshrl.u32 %v1026, 7
  %v1028 = vsub.s32 0, %v1027
  %v1029 = vrot.slane %v1024, %v1028
  %1031 = vmatprep.subr.mxu0 0.0
  %1032 = vmatpush1.msra.mxu0 %v975
  %1033 = vmatprep.subr.mxu0 0.0
  %1034 = vmatpush1.msra.mxu0 %v974
  %1035 = vmatprep.subr.mxu0 0.0
  %1036 = vmatpush1.msra.mxu0 %v973
  %1037 = vmatprep.subr.mxu0 0.0
  %1038 = vmatpush1.msra.mxu0 %v972
  %1039 = vmatprep.subr.mxu0 0.0
  %1040 = vmatpush1.msra.mxu0 %v971
  %1041 = vmatprep.subr.mxu0 0.0
  %1042 = vmatpush1.msra.mxu0 %v970
  %1043 = vmatprep.subr.mxu0 0.0
  %1044 = vmatpush1.msra.mxu0 %v969
  %1045 = vmatprep.subr.mxu0 0.0
  %1046 = vmatpush1.msra.mxu0 %v968
  %1047 = vmatprep.subr.mxu0 0.0
  %1048 = vmatpush1.msra.mxu0 %v967
  %1049 = vmatprep.subr.mxu0 0.0
  %1050 = vmatpush1.msra.mxu0 %v966
  %1051 = vmatprep.subr.mxu0 0.0
  %1052 = vmatpush1.msra.mxu0 %v965
  %1053 = vmatprep.subr.mxu0 0.0
  %1054 = vmatpush1.msra.mxu0 %v964
  %1055 = vmatprep.subr.mxu0 0.0
  %1056 = vmatpush1.msra.mxu0 %v963
  %1057 = vmatprep.subr.mxu0 0.0
  %1058 = vmatpush1.msra.mxu0 %v962
  %1059 = vmatprep.subr.mxu0 0.0
  %1060 = vmatpush1.msra.mxu0 %v961
  %1061 = vmatprep.subr.mxu0 0.0
  %1062 = vmatpush1.msra.mxu0 %v960
  %1063 = vmatprep.subr.mxu0 0.0
  %1064 = vmatpush2.msra.mxu0 %v991
  %1065 = vmatprep.subr.mxu0 0.0
  %1066 = vmatpush2.msra.mxu0 %v990
  %1067 = vmatprep.subr.mxu0 0.0
  %1068 = vmatpush2.msra.mxu0 %v989
  %1069 = vmatprep.subr.mxu0 0.0
  %1070 = vmatpush2.msra.mxu0 %v988
  %1071 = vmatprep.subr.mxu0 0.0
  %1072 = vmatpush2.msra.mxu0 %v987
  %1073 = vmatprep.subr.mxu0 0.0
  %1074 = vmatpush2.msra.mxu0 %v986
  %1075 = vmatprep.subr.mxu0 0.0
  %1076 = vmatpush2.msra.mxu0 %v985
  %1077 = vmatprep.subr.mxu0 0.0
  %1078 = vmatpush2.msra.mxu0 %v984
  %1079 = vmatprep.subr.mxu0 0.0
  %1080 = vmatpush2.msra.mxu0 %v983
  %1081 = vmatprep.subr.mxu0 0.0
  %1082 = vmatpush2.msra.mxu0 %v982
  %1083 = vmatprep.subr.mxu0 0.0
  %1084 = vmatpush2.msra.mxu0 %v981
  %1085 = vmatprep.subr.mxu0 0.0
  %1086 = vmatpush2.msra.mxu0 %v980
  %1087 = vmatprep.subr.mxu0 0.0
  %1088 = vmatpush2.msra.mxu0 %v979
  %1089 = vmatprep.subr.mxu0 0.0
  %1090 = vmatpush2.msra.mxu0 %v978
  %1091 = vmatprep.subr.mxu0 0.0
  %1092 = vmatpush2.msra.mxu0 %v977
  %1093 = vmatprep.subr.mxu0 0.0
  %1094 = vmatpush2.msra.mxu0 %v976
  %1095 = vmatprep.mubr.f32.mxu0 %v945
  %1096 = vmatmul.mubr.f32.gmra.mxu0 %v944
  %v1097 = vpop.f32.mrf.mxu0
  %v1098 = vadd.f32 %v1029, %v1097
  %v1099 = vpop.f32.mrf.mxu0
  %1100 = vmatprep.mubr.f32.mxu0 %v949
  %1101 = vmatmul.mubr.f32.gmra.mxu0 %v948
  %v1102 = vpop.f32.mrf.mxu0
  %v1103 = vadd.f32 %v1029, %v1102
  %v1104 = vpop.f32.mrf.mxu0
  %1105 = vmatprep.mubr.f32.mxu0 %v953
  %1106 = vmatmul.mubr.f32.gmra.mxu0 %v952
  %v1107 = vpop.f32.mrf.mxu0
  %v1108 = vadd.f32 %v1029, %v1107
  %v1109 = vpop.f32.mrf.mxu0
  %1110 = vmatprep.mubr.f32.mxu0 %v957
  %1111 = vmatmul.mubr.f32.gmra.mxu0 %v956
  %v1112 = vpop.f32.mrf.mxu0
  %v1113 = vadd.f32 %v1029, %v1112
  %v1114 = vpop.f32.mrf.mxu0
  %1115 = vdwg.mxu0
  %1116 = vmatprep.subr.mxu0 0.0
  %1117 = vmatpush1.msra.mxu0 %v1007
  %1118 = vmatprep.subr.mxu0 0.0
  %1119 = vmatpush1.msra.mxu0 %v1006
  %1120 = vmatprep.subr.mxu0 0.0
  %1121 = vmatpush1.msra.mxu0 %v1005
  %1122 = vmatprep.subr.mxu0 0.0
  %1123 = vmatpush1.msra.mxu0 %v1004
  %1124 = vmatprep.subr.mxu0 0.0
  %1125 = vmatpush1.msra.mxu0 %v1003
  %1126 = vmatprep.subr.mxu0 0.0
  %1127 = vmatpush1.msra.mxu0 %v1002
  %1128 = vmatprep.subr.mxu0 0.0
  %1129 = vmatpush1.msra.mxu0 %v1001
  %1130 = vmatprep.subr.mxu0 0.0
  %1131 = vmatpush1.msra.mxu0 %v1000
  %1132 = vmatprep.subr.mxu0 0.0
  %1133 = vmatpush1.msra.mxu0 %v999
  %1134 = vmatprep.subr.mxu0 0.0
  %1135 = vmatpush1.msra.mxu0 %v998
  %1136 = vmatprep.subr.mxu0 0.0
  %1137 = vmatpush1.msra.mxu0 %v997
  %1138 = vmatprep.subr.mxu0 0.0
  %1139 = vmatpush1.msra.mxu0 %v996
  %1140 = vmatprep.subr.mxu0 0.0
  %1141 = vmatpush1.msra.mxu0 %v995
  %1142 = vmatprep.subr.mxu0 0.0
  %1143 = vmatpush1.msra.mxu0 %v994
  %1144 = vmatprep.subr.mxu0 0.0
  %1145 = vmatpush1.msra.mxu0 %v993
  %1146 = vmatprep.subr.mxu0 0.0
  %1147 = vmatpush1.msra.mxu0 %v992
  %1148 = vmatprep.subr.mxu0 0.0
  %1149 = vmatpush2.msra.mxu0 %v1023
  %1150 = vmatprep.subr.mxu0 0.0
  %1151 = vmatpush2.msra.mxu0 %v1022
  %1152 = vmatprep.subr.mxu0 0.0
  %1153 = vmatpush2.msra.mxu0 %v1021
  %1154 = vmatprep.subr.mxu0 0.0
  %1155 = vmatpush2.msra.mxu0 %v1020
  %1156 = vmatprep.subr.mxu0 0.0
  %1157 = vmatpush2.msra.mxu0 %v1019
  %1158 = vmatprep.subr.mxu0 0.0
  %1159 = vmatpush2.msra.mxu0 %v1018
  %1160 = vmatprep.subr.mxu0 0.0
  %1161 = vmatpush2.msra.mxu0 %v1017
  %1162 = vmatprep.subr.mxu0 0.0
  %1163 = vmatpush2.msra.mxu0 %v1016
  %1164 = vmatprep.subr.mxu0 0.0
  %1165 = vmatpush2.msra.mxu0 %v1015
  %1166 = vmatprep.subr.mxu0 0.0
  %1167 = vmatpush2.msra.mxu0 %v1014
  %1168 = vmatprep.subr.mxu0 0.0
  %1169 = vmatpush2.msra.mxu0 %v1013
  %1170 = vmatprep.subr.mxu0 0.0
  %1171 = vmatpush2.msra.mxu0 %v1012
  %1172 = vmatprep.subr.mxu0 0.0
  %1173 = vmatpush2.msra.mxu0 %v1011
  %1174 = vmatprep.subr.mxu0 0.0
  %1175 = vmatpush2.msra.mxu0 %v1010
  %1176 = vmatprep.subr.mxu0 0.0
  %1177 = vmatpush2.msra.mxu0 %v1009
  %1178 = vmatprep.subr.mxu0 0.0
  %1179 = vmatpush2.msra.mxu0 %v1008
  %1180 = vmatprep.mubr.f32.mxu0 %v947
  %1181 = vmatmul.mubr.f32.gmra.mxu0 %v946
  %v1182 = vpop.f32.mrf.mxu0
  %v1183 = vadd.f32 %v1098, %v1182
  %v1184 = vpop.f32.mrf.mxu0
  %1185 = vmatprep.mubr.f32.mxu0 %v951
  %1186 = vmatmul.mubr.f32.gmra.mxu0 %v950
  %v1187 = vpop.f32.mrf.mxu0
  %v1188 = vadd.f32 %v1103, %v1187
  %v1189 = vpop.f32.mrf.mxu0
  %1190 = vmatprep.mubr.f32.mxu0 %v955
  %1191 = vmatmul.mubr.f32.gmra.mxu0 %v954
  %v1192 = vpop.f32.mrf.mxu0
  %v1193 = vadd.f32 %v1108, %v1192
  %v1194 = vpop.f32.mrf.mxu0
  %1195 = vmatprep.mubr.f32.mxu0 %v959
  %1196 = vmatmul.mubr.f32.gmra.mxu0 %v958
  %v1197 = vpop.f32.mrf.mxu0
  %v1198 = vadd.f32 %v1113, %v1197
  %v1199 = vpop.f32.mrf.mxu0
  %1200 = vdwg.mxu0
  %1201 = vst [vmem:[%s7] sm:$0xff] %v1183
  %1202 = vst [vmem:[%s7 + $0x8] sm:$0xff] %v1188
  %1203 = vst [vmem:[%s7 + $0x10] sm:$0xff] %v1193
  %1204 = vst [vmem:[%s7 + $0x18] sm:$0xff] %v1198
  // Predicated region
  $region30: #{discriminator_forward.1} parent=0 // pred_check
    _
  $region31: #{discriminator_forward.1} parent=0 // pred_check_branch
    %1206 = sbr.rel (0) target = $region33
  $region32: #{discriminator_forward.1} parent=0 // pred_region
    _
  $region33: #{discriminator_forward.1} parent=0 // pred_fallthru
    _
  // Predicated region
  $region34: #{discriminator_forward.1} parent=0 // pred_check
    _
  $region35: #{discriminator_forward.1} parent=0 // pred_check_branch
    %1208 = sbr.rel (0) target = $region37
  $region36: #{discriminator_forward.1} parent=0 // pred_region
    _
  $region37: #{discriminator_forward.1} parent=0 // pred_fallthru
    _

</llo_original>
